<compile_context>
chip_gen: v6e
topology: v6e:2x2x1
jax: 0.10.0
libtpu: 0.0.40
codegen_flags: <defaults>
</compile_context>

<pallas_src>
import functools

import jax
import jax.numpy as jnp
from jax import lax
from jax.experimental import pallas as pl
from jax.experimental.pallas import tpu as pltpu

_TI = 64     # output pixels i per grid step (sublane axis)
_JC = 128    # source pixels j per inner-loop iteration (lane axis)
_BIG = 1e30  # sentinel "no candidate" value (plain Python float!)


# ----------------------------- fused kernel ----------------------------------
def _hausdorff_kernel(flags_ref, pred_col_ref, targ_col_ref, coords_i_ref,
                      pred_ch_ref, targ_ch_ref, yj_ref, xj_ref, out_ref, *,
                      alpha):
    """One grid step = one (batch b, i-tile it).

    flags_ref     : SMEM (B, 4) int32 [p_has_fg, p_has_bg, t_has_fg, t_has_bg]
    pred_col_ref  : (1, TI, 1)   prediction values at output pixels i
    targ_col_ref  : (1, TI, 1)   target values at output pixels i
    coords_i_ref  : (TI, 2)      (y, x) coordinates of output pixels i
    pred_ch_ref   : (1, n_chunks, JC) prediction values of source pixels j
    targ_ch_ref   : (1, n_chunks, JC) target values of source pixels j
    yj_ref/xj_ref : (n_chunks, JC)    y / x coordinates of source pixels j
    out_ref       : (1, 1, 1, 128)    partial loss (lane-broadcast)
    """
    ti = pred_col_ref.shape[1]
    n_chunks, jc = yj_ref.shape
    b = pl.program_id(0)

    pred_i = pred_col_ref[0]                      # (TI, 1)
    targ_i = targ_col_ref[0]
    ci_p = pred_i > 0.5                           # class of pixel i (pred)
    ci_t = targ_i > 0.5                           # class of pixel i (target)

    # loop-invariant lane-broadcasts hoisted out of the j loop
    # (JAX does not CSE broadcast_in_dim); 8 vregs each, register-resident.
    yi_b = jnp.broadcast_to(coords_i_ref[:, 0:1], (ti, jc))
    xi_b = jnp.broadcast_to(coords_i_ref[:, 1:2], (ti, jc))

    init = jnp.full((ti, jc), _BIG, dtype=jnp.float32)

    def body(c, carry):
        cp, ct = carry
        cs = pl.ds(c, 1)
        yj = yj_ref[cs, :]                        # (1, JC)
        xj = xj_ref[cs, :]
        pj = pred_ch_ref[0, cs, :]                # (1, JC)
        tj = targ_ch_ref[0, cs, :]

        dy = yj - yi_b                            # (TI, JC)
        dx = xj - xi_b
        d2 = dy * dy + dx * dx

        # distance to the nearest OPPOSITE-class pixel == edt(fg) + edt(bg):
        # a single masked running min per image replaces the old 4-carry form.
        opp_p = jnp.logical_xor(pj > 0.5, ci_p)   # (TI, JC)
        opp_t = jnp.logical_xor(tj > 0.5, ci_t)
        cp = jnp.minimum(cp, jnp.where(opp_p, d2, _BIG))
        ct = jnp.minimum(ct, jnp.where(opp_t, d2, _BIG))
        return cp, ct

    cp, ct = lax.fori_loop(0, n_chunks, body, (init, init),
                           unroll=min(4, n_chunks))

    # collapse the lane (j) axis once -> per-pixel min over all source pixels
    min_p = jnp.min(cp, axis=1, keepdims=True)    # (TI, 1)
    min_t = jnp.min(ct, axis=1, keepdims=True)

    # per-batch class-existence flags, precomputed in the wrapper (SMEM scalars)
    valid_p = jnp.logical_and(flags_ref[b, 0] > 0, flags_ref[b, 1] > 0)
    valid_t = jnp.logical_and(flags_ref[b, 2] > 0, flags_ref[b, 3] > 0)

    # Reference leaves the whole field at 0 when there is no foreground.
    # TODO(synk): an all-foreground input (no bg pixel) is also clamped to 0;
    # scipy's EDT of a mask with no zeros is ill-defined anyway.
    d2_p = jnp.where(valid_p, min_p, 0.0)
    d2_t = jnp.where(valid_t, min_t, 0.0)
    if alpha == 2.0:
        distance = d2_p + d2_t                    # sqrt(d)**2 == d exactly
    else:
        distance = (jnp.power(jnp.sqrt(d2_p), alpha) +
                    jnp.power(jnp.sqrt(d2_t), alpha))

    pred_error = (pred_i - targ_i) ** 2           # (TI, 1)
    partial = jnp.sum(pred_error * distance)      # scalar

    # lane-broadcast the scalar so the output store is a plain unmasked vst
    out_ref[...] = jnp.broadcast_to(partial, (1, 1, 1, 128))


# ----------------------------- wrapper ---------------------------------------
@functools.partial(jax.jit, static_argnames=("alpha",))
def hausdorff_dt_loss(pred, target, alpha=2.0):
    """JAX/Pallas equivalent of HausdorffDTLoss.forward (2D, single channel).

    pred, target: (B, 1, H, W) float, single binary channel (NCHW).
    Returns scalar f32 loss.
    """
    # TODO(synk): 3D (B, 1, X, Y, Z) inputs and the debug=True path not implemented.
    assert pred.ndim == 4 and pred.shape == target.shape and pred.shape[1] == 1
    B, C, H, W = pred.shape
    N = H * W
    n_pad = (-N) % _JC                 # pad flattened pixel count to a multiple of 128
    n_tot = N + n_pad
    ti = _TI                            # 64 always divides n_tot (multiple of 128)
    n_tiles = n_tot // ti
    n_chunks = n_tot // _JC

    pred_f = pred.astype(jnp.float32).reshape(B, N)
    targ_f = target.astype(jnp.float32).reshape(B, N)

    # per-batch class-existence flags (once here, SMEM scalars in the kernel)
    fg_p = pred_f > 0.5
    fg_t = targ_f > 0.5
    flags = jnp.stack(
        [jnp.any(fg_p, axis=1), jnp.any(~fg_p, axis=1),
         jnp.any(fg_t, axis=1), jnp.any(~fg_t, axis=1)],
        axis=1).astype(jnp.int32)                                  # (B, 4)

    # Padded pixels: value 0 -> zero pred_error weight on the i side; on the j
    # side they get far-away coordinates so they can never win an
    # opposite-class minimum while a real opposite-class pixel exists.
    pred_pad = jnp.pad(pred_f, ((0, 0), (0, n_pad)))
    targ_pad = jnp.pad(targ_f, ((0, 0), (0, n_pad)))

    idx = jnp.arange(N, dtype=jnp.int32)
    y = (idx // W).astype(jnp.float32)
    x = (idx % W).astype(jnp.float32)
    far = float(2 * (H + W) + 16)
    coords_i = jnp.stack([jnp.pad(y, (0, n_pad)), jnp.pad(x, (0, n_pad))],
                         axis=1)                                   # (n_tot, 2)
    yj_ch = jnp.pad(y, (0, n_pad), constant_values=far).reshape(n_chunks, _JC)
    xj_ch = jnp.pad(x, (0, n_pad), constant_values=far).reshape(n_chunks, _JC)

    pred_col = pred_pad.reshape(B, n_tot, 1)       # i-side (TI,1) column blocks
    targ_col = targ_pad.reshape(B, n_tot, 1)
    pred_ch = pred_pad.reshape(B, n_chunks, _JC)   # j-side lane-dense chunks
    targ_ch = targ_pad.reshape(B, n_chunks, _JC)

    kernel = functools.partial(_hausdorff_kernel, alpha=float(alpha))

    grid_spec = pltpu.PrefetchScalarGridSpec(
        num_scalar_prefetch=1,
        grid=(B, n_tiles),
        in_specs=[
            pl.BlockSpec((1, ti, 1), lambda b, it, sf: (b, it, 0)),      # pred_i
            pl.BlockSpec((1, ti, 1), lambda b, it, sf: (b, it, 0)),      # target_i
            pl.BlockSpec((ti, 2), lambda b, it, sf: (it, 0)),            # coords_i
            pl.BlockSpec((1, n_chunks, _JC), lambda b, it, sf: (b, 0, 0)),  # pred_j
            pl.BlockSpec((1, n_chunks, _JC), lambda b, it, sf: (b, 0, 0)),  # target_j
            pl.BlockSpec((n_chunks, _JC), lambda b, it, sf: (0, 0)),     # y_j
            pl.BlockSpec((n_chunks, _JC), lambda b, it, sf: (0, 0)),     # x_j
        ],
        out_specs=pl.BlockSpec((1, 1, 1, 128), lambda b, it, sf: (b, it, 0, 0)),
    )

    partials = pl.pallas_call(
        kernel,
        out_shape=jax.ShapeDtypeStruct((B, n_tiles, 1, 128), jnp.float32),
        grid_spec=grid_spec,
        compiler_params=pltpu.CompilerParams(
            dimension_semantics=("parallel", "parallel"),
            vmem_limit_bytes=32 * 1024 * 1024,   # well above actual use; <= v7x physical
        ),
    )(flags, pred_col, targ_col, coords_i, pred_ch, targ_ch, yj_ch, xj_ch)

    # each grid step contributed one partial sum (broadcast across lanes)
    return jnp.sum(partials[:, :, 0, 0]) / float(B * C * H * W)


if __name__ == "__main__":
    key = jax.random.PRNGKey(0)
    k1, k2 = jax.random.split(key)
    B, C, H, W = 2, 1, 16, 16
    pred = jax.random.uniform(k1, (B, C, H, W), dtype=jnp.float32)             # soft predictions
    target = (jax.random.uniform(k2, (B, C, H, W)) > 0.5).astype(jnp.float32)  # binary target

    loss = hausdorff_dt_loss(pred, target, alpha=2.0)
    jax.block_until_ready(loss)
    print("KERNEL_OK")
</pallas_src>

<mosaic_0001>
module attributes {stable_mosaic.version = 11 : i64} {
  func.func @_hausdorff_kernel(%arg0: i32, %arg1: i32, %arg2: memref<2x4xi32, #tpu.memory_space<smem>>, %arg3: memref<1x64x1xf32, #tpu.memory_space<vmem>>, %arg4: memref<1x64x1xf32, #tpu.memory_space<vmem>>, %arg5: memref<64x2xf32, #tpu.memory_space<vmem>>, %arg6: memref<1x2x128xf32, #tpu.memory_space<vmem>>, %arg7: memref<1x2x128xf32, #tpu.memory_space<vmem>>, %arg8: memref<2x128xf32, #tpu.memory_space<vmem>>, %arg9: memref<2x128xf32, #tpu.memory_space<vmem>>, %arg10: memref<1x1x1x128xf32, #tpu.memory_space<vmem>>) attributes {dimension_semantics = [#tpu.dimension_semantics<parallel>, #tpu.dimension_semantics<parallel>], iteration_bounds = array<i64: 2, 4>, scalar_prefetch = 1 : i64, scratch_operands = 0 : i64, tpu.core_type = #tpu.core_type<tc>, window_params = [{transform_indices = @transform_0, window_bounds = array<i64: 1, 64, 1>}, {transform_indices = @transform_1, window_bounds = array<i64: 1, 64, 1>}, {transform_indices = @transform_2, window_bounds = array<i64: 64, 2>}, {transform_indices = @transform_3, window_bounds = array<i64: 1, 2, 128>}, {transform_indices = @transform_4, window_bounds = array<i64: 1, 2, 128>}, {pipeline_mode = #tpu.pipeline_mode<synchronous>, transform_indices = @transform_5, window_bounds = array<i64: 2, 128>}, {pipeline_mode = #tpu.pipeline_mode<synchronous>, transform_indices = @transform_6, window_bounds = array<i64: 2, 128>}, {transform_indices = @transform_7, window_bounds = array<i64: 1, 1, 1, 128>}]} {
    %c0 = arith.constant 0 : index
    %c0_0 = arith.constant 0 : index
    %c0_1 = arith.constant 0 : index
    %0 = vector.load %arg3[%c0, %c0_0, %c0_1] : memref<1x64x1xf32, #tpu.memory_space<vmem>>, vector<1x64x1xf32>
    %1 = vector.shape_cast %0 : vector<1x64x1xf32> to vector<64x1xf32>
    %c0_2 = arith.constant 0 : index
    %c0_3 = arith.constant 0 : index
    %c0_4 = arith.constant 0 : index
    %2 = vector.load %arg4[%c0_2, %c0_3, %c0_4] : memref<1x64x1xf32, #tpu.memory_space<vmem>>, vector<1x64x1xf32>
    %3 = vector.shape_cast %2 : vector<1x64x1xf32> to vector<64x1xf32>
    %cst = arith.constant 5.000000e-01 : f32
    %4 = vector.broadcast %cst : f32 to vector<64x1xf32>
    %5 = arith.cmpf ogt, %1, %4 : vector<64x1xf32>
    %cst_5 = arith.constant 5.000000e-01 : f32
    %6 = vector.broadcast %cst_5 : f32 to vector<64x1xf32>
    %7 = arith.cmpf ogt, %3, %6 : vector<64x1xf32>
    %c0_6 = arith.constant 0 : index
    %c0_7 = arith.constant 0 : index
    %8 = vector.load %arg5[%c0_6, %c0_7] : memref<64x2xf32, #tpu.memory_space<vmem>>, vector<64x1xf32>
    %9 = vector.shape_cast %8 : vector<64x1xf32> to vector<64x1xf32>
    %10 = vector.broadcast %9 : vector<64x1xf32> to vector<64x128xf32>
    %c0_8 = arith.constant 0 : index
    %c1 = arith.constant 1 : index
    %11 = vector.load %arg5[%c0_8, %c1] : memref<64x2xf32, #tpu.memory_space<vmem>>, vector<64x1xf32>
    %12 = vector.shape_cast %11 : vector<64x1xf32> to vector<64x1xf32>
    %13 = vector.broadcast %12 : vector<64x1xf32> to vector<64x128xf32>
    %cst_9 = arith.constant 1.000000e+30 : f32
    %14 = vector.broadcast %cst_9 : f32 to vector<64x128xf32>
    %c0_i32 = arith.constant 0 : i32
    %15 = arith.index_cast %c0_i32 : i32 to index
    %c0_10 = arith.constant 0 : index
    %16 = vector.load %arg8[%15, %c0_10] : memref<2x128xf32, #tpu.memory_space<vmem>>, vector<1x128xf32>
    %17 = arith.index_cast %c0_i32 : i32 to index
    %c0_11 = arith.constant 0 : index
    %18 = vector.load %arg9[%17, %c0_11] : memref<2x128xf32, #tpu.memory_space<vmem>>, vector<1x128xf32>
    %c0_12 = arith.constant 0 : index
    %19 = arith.index_cast %c0_i32 : i32 to index
    %c0_13 = arith.constant 0 : index
    %20 = vector.load %arg6[%c0_12, %19, %c0_13] : memref<1x2x128xf32, #tpu.memory_space<vmem>>, vector<1x1x128xf32>
    %21 = vector.shape_cast %20 : vector<1x1x128xf32> to vector<1x128xf32>
    %c0_14 = arith.constant 0 : index
    %22 = arith.index_cast %c0_i32 : i32 to index
    %c0_15 = arith.constant 0 : index
    %23 = vector.load %arg7[%c0_14, %22, %c0_15] : memref<1x2x128xf32, #tpu.memory_space<vmem>>, vector<1x1x128xf32>
    %24 = vector.shape_cast %23 : vector<1x1x128xf32> to vector<1x128xf32>
    %25 = vector.broadcast %16 : vector<1x128xf32> to vector<64x128xf32>
    %26 = arith.subf %25, %10 : vector<64x128xf32>
    %27 = vector.broadcast %18 : vector<1x128xf32> to vector<64x128xf32>
    %28 = arith.subf %27, %13 : vector<64x128xf32>
    %29 = arith.mulf %26, %26 : vector<64x128xf32>
    %30 = arith.mulf %28, %28 : vector<64x128xf32>
    %31 = arith.addf %29, %30 : vector<64x128xf32>
    %cst_16 = arith.constant 5.000000e-01 : f32
    %32 = vector.broadcast %cst_16 : f32 to vector<1x128xf32>
    %33 = arith.cmpf ogt, %21, %32 : vector<1x128xf32>
    %34 = vector.broadcast %33 : vector<1x128xi1> to vector<64x128xi1>
    %35 = vector.broadcast %5 : vector<64x1xi1> to vector<64x128xi1>
    %36 = arith.xori %34, %35 : vector<64x128xi1>
    %cst_17 = arith.constant 5.000000e-01 : f32
    %37 = vector.broadcast %cst_17 : f32 to vector<1x128xf32>
    %38 = arith.cmpf ogt, %24, %37 : vector<1x128xf32>
    %39 = vector.broadcast %38 : vector<1x128xi1> to vector<64x128xi1>
    %40 = vector.broadcast %7 : vector<64x1xi1> to vector<64x128xi1>
    %41 = arith.xori %39, %40 : vector<64x128xi1>
    %cst_18 = arith.constant 1.000000e+30 : f32
    %42 = vector.broadcast %cst_18 : f32 to vector<64x128xf32>
    %43 = arith.select %36, %31, %42 : vector<64x128xi1>, vector<64x128xf32>
    %44 = arith.minimumf %14, %43 : vector<64x128xf32>
    %cst_19 = arith.constant 1.000000e+30 : f32
    %45 = vector.broadcast %cst_19 : f32 to vector<64x128xf32>
    %46 = arith.select %41, %31, %45 : vector<64x128xi1>, vector<64x128xf32>
    %47 = arith.minimumf %14, %46 : vector<64x128xf32>
    %c1_i32 = arith.constant 1 : i32
    %48 = arith.index_cast %c1_i32 : i32 to index
    %c0_20 = arith.constant 0 : index
    %49 = vector.load %arg8[%48, %c0_20] : memref<2x128xf32, #tpu.memory_space<vmem>>, vector<1x128xf32>
    %50 = arith.index_cast %c1_i32 : i32 to index
    %c0_21 = arith.constant 0 : index
    %51 = vector.load %arg9[%50, %c0_21] : memref<2x128xf32, #tpu.memory_space<vmem>>, vector<1x128xf32>
    %c0_22 = arith.constant 0 : index
    %52 = arith.index_cast %c1_i32 : i32 to index
    %c0_23 = arith.constant 0 : index
    %53 = vector.load %arg6[%c0_22, %52, %c0_23] : memref<1x2x128xf32, #tpu.memory_space<vmem>>, vector<1x1x128xf32>
    %54 = vector.shape_cast %53 : vector<1x1x128xf32> to vector<1x128xf32>
    %c0_24 = arith.constant 0 : index
    %55 = arith.index_cast %c1_i32 : i32 to index
    %c0_25 = arith.constant 0 : index
    %56 = vector.load %arg7[%c0_24, %55, %c0_25] : memref<1x2x128xf32, #tpu.memory_space<vmem>>, vector<1x1x128xf32>
    %57 = vector.shape_cast %56 : vector<1x1x128xf32> to vector<1x128xf32>
    %58 = vector.broadcast %49 : vector<1x128xf32> to vector<64x128xf32>
    %59 = arith.subf %58, %10 : vector<64x128xf32>
    %60 = vector.broadcast %51 : vector<1x128xf32> to vector<64x128xf32>
    %61 = arith.subf %60, %13 : vector<64x128xf32>
    %62 = arith.mulf %59, %59 : vector<64x128xf32>
    %63 = arith.mulf %61, %61 : vector<64x128xf32>
    %64 = arith.addf %62, %63 : vector<64x128xf32>
    %cst_26 = arith.constant 5.000000e-01 : f32
    %65 = vector.broadcast %cst_26 : f32 to vector<1x128xf32>
    %66 = arith.cmpf ogt, %54, %65 : vector<1x128xf32>
    %67 = vector.broadcast %66 : vector<1x128xi1> to vector<64x128xi1>
    %68 = vector.broadcast %5 : vector<64x1xi1> to vector<64x128xi1>
    %69 = arith.xori %67, %68 : vector<64x128xi1>
    %cst_27 = arith.constant 5.000000e-01 : f32
    %70 = vector.broadcast %cst_27 : f32 to vector<1x128xf32>
    %71 = arith.cmpf ogt, %57, %70 : vector<1x128xf32>
    %72 = vector.broadcast %71 : vector<1x128xi1> to vector<64x128xi1>
    %73 = vector.broadcast %7 : vector<64x1xi1> to vector<64x128xi1>
    %74 = arith.xori %72, %73 : vector<64x128xi1>
    %cst_28 = arith.constant 1.000000e+30 : f32
    %75 = vector.broadcast %cst_28 : f32 to vector<64x128xf32>
    %76 = arith.select %69, %64, %75 : vector<64x128xi1>, vector<64x128xf32>
    %77 = arith.minimumf %44, %76 : vector<64x128xf32>
    %cst_29 = arith.constant 1.000000e+30 : f32
    %78 = vector.broadcast %cst_29 : f32 to vector<64x128xf32>
    %79 = arith.select %74, %64, %78 : vector<64x128xi1>, vector<64x128xf32>
    %80 = arith.minimumf %47, %79 : vector<64x128xf32>
    %c2_i32 = arith.constant 2 : i32
    %cst_30 = arith.constant dense<0x7F800000> : vector<64xf32>
    %81 = vector.multi_reduction <minimumf>, %77, %cst_30 [1] : vector<64x128xf32> to vector<64xf32>
    %82 = vector.shape_cast %81 : vector<64xf32> to vector<64x1xf32>
    %cst_31 = arith.constant dense<0x7F800000> : vector<64xf32>
    %83 = vector.multi_reduction <minimumf>, %80, %cst_31 [1] : vector<64x128xf32> to vector<64xf32>
    %84 = vector.shape_cast %83 : vector<64xf32> to vector<64x1xf32>
    %85 = arith.index_cast %arg0 : i32 to index
    %c0_32 = arith.constant 0 : index
    %86 = memref.load %arg2[%85, %c0_32] : memref<2x4xi32, #tpu.memory_space<smem>>
    %c0_i32_33 = arith.constant 0 : i32
    %87 = arith.cmpi sgt, %86, %c0_i32_33 : i32
    %88 = arith.index_cast %arg0 : i32 to index
    %c1_34 = arith.constant 1 : index
    %89 = memref.load %arg2[%88, %c1_34] : memref<2x4xi32, #tpu.memory_space<smem>>
    %c0_i32_35 = arith.constant 0 : i32
    %90 = arith.cmpi sgt, %89, %c0_i32_35 : i32
    %91 = arith.andi %87, %90 : i1
    %92 = arith.index_cast %arg0 : i32 to index
    %c2 = arith.constant 2 : index
    %93 = memref.load %arg2[%92, %c2] : memref<2x4xi32, #tpu.memory_space<smem>>
    %c0_i32_36 = arith.constant 0 : i32
    %94 = arith.cmpi sgt, %93, %c0_i32_36 : i32
    %95 = arith.index_cast %arg0 : i32 to index
    %c3 = arith.constant 3 : index
    %96 = memref.load %arg2[%95, %c3] : memref<2x4xi32, #tpu.memory_space<smem>>
    %c0_i32_37 = arith.constant 0 : i32
    %97 = arith.cmpi sgt, %96, %c0_i32_37 : i32
    %98 = arith.andi %94, %97 : i1
    %cst_38 = arith.constant 0.000000e+00 : f32
    %99 = vector.broadcast %cst_38 : f32 to vector<64x1xf32>
    %100 = arith.select %91, %82, %99 : vector<64x1xf32>
    %cst_39 = arith.constant 0.000000e+00 : f32
    %101 = vector.broadcast %cst_39 : f32 to vector<64x1xf32>
    %102 = arith.select %98, %84, %101 : vector<64x1xf32>
    %103 = arith.addf %100, %102 : vector<64x1xf32>
    %104 = arith.subf %1, %3 : vector<64x1xf32>
    %105 = arith.mulf %104, %104 : vector<64x1xf32>
    %106 = arith.mulf %105, %103 : vector<64x1xf32>
    %107 = vector.shape_cast %106 : vector<64x1xf32> to vector<1x64x1xf32>
    %cst_40 = arith.constant dense<0.000000e+00> : vector<1xf32>
    %108 = vector.multi_reduction <add>, %107, %cst_40 [1, 2] : vector<1x64x1xf32> to vector<1xf32>
    %109 = vector.shape_cast %108 : vector<1xf32> to vector<1x1x1xf32>
    %110 = vector.extract %109[0, 0, 0] : f32 from vector<1x1x1xf32>
    %111 = vector.broadcast %110 : f32 to vector<1x1x1x128xf32>
    %c0_41 = arith.constant 0 : index
    %c0_42 = arith.constant 0 : index
    %c0_43 = arith.constant 0 : index
    %c0_44 = arith.constant 0 : index
    %112 = vector.load %arg10[%c0_41, %c0_42, %c0_43, %c0_44] : memref<1x1x1x128xf32, #tpu.memory_space<vmem>>, vector<1x1x1x128xf32>
    tpu.vector_store %arg10[%c0_41, %c0_42, %c0_43, %c0_44], %111 {strides = array<i32>} : memref<1x1x1x128xf32, #tpu.memory_space<vmem>>, vector<1x1x1x128xf32>,
    return
  }
  func.func @transform_0(%arg0: i32, %arg1: i32, %arg2: memref<2x4xi32, #tpu.memory_space<smem>>) -> (i32, i32, i32) {
    %c0_i32 = arith.constant 0 : i32
    %c0_i32_0 = arith.constant 0 : i32
    return %arg0, %arg1, %c0_i32 : i32, i32, i32
  }
  func.func @transform_1(%arg0: i32, %arg1: i32, %arg2: memref<2x4xi32, #tpu.memory_space<smem>>) -> (i32, i32, i32) {
    %c0_i32 = arith.constant 0 : i32
    %c0_i32_0 = arith.constant 0 : i32
    return %arg0, %arg1, %c0_i32 : i32, i32, i32
  }
  func.func @transform_2(%arg0: i32, %arg1: i32, %arg2: memref<2x4xi32, #tpu.memory_space<smem>>) -> (i32, i32) {
    %c0_i32 = arith.constant 0 : i32
    %c0_i32_0 = arith.constant 0 : i32
    return %arg1, %c0_i32 : i32, i32
  }
  func.func @transform_3(%arg0: i32, %arg1: i32, %arg2: memref<2x4xi32, #tpu.memory_space<smem>>) -> (i32, i32, i32) {
    %c0_i32 = arith.constant 0 : i32
    %c0_i32_0 = arith.constant 0 : i32
    %c0_i32_1 = arith.constant 0 : i32
    return %arg0, %c0_i32, %c0_i32_0 : i32, i32, i32
  }
  func.func @transform_4(%arg0: i32, %arg1: i32, %arg2: memref<2x4xi32, #tpu.memory_space<smem>>) -> (i32, i32, i32) {
    %c0_i32 = arith.constant 0 : i32
    %c0_i32_0 = arith.constant 0 : i32
    %c0_i32_1 = arith.constant 0 : i32
    return %arg0, %c0_i32, %c0_i32_0 : i32, i32, i32
  }
  func.func @transform_5(%arg0: i32, %arg1: i32, %arg2: memref<2x4xi32, #tpu.memory_space<smem>>) -> (i32, i32) {
    %c0_i32 = arith.constant 0 : i32
    %c0_i32_0 = arith.constant 0 : i32
    %c0_i32_1 = arith.constant 0 : i32
    return %c0_i32, %c0_i32_0 : i32, i32
  }
  func.func @transform_6(%arg0: i32, %arg1: i32, %arg2: memref<2x4xi32, #tpu.memory_space<smem>>) -> (i32, i32) {
    %c0_i32 = arith.constant 0 : i32
    %c0_i32_0 = arith.constant 0 : i32
    %c0_i32_1 = arith.constant 0 : i32
    return %c0_i32, %c0_i32_0 : i32, i32
  }
  func.func @transform_7(%arg0: i32, %arg1: i32, %arg2: memref<2x4xi32, #tpu.memory_space<smem>>) -> (i32, i32, i32, i32) {
    %c0_i32 = arith.constant 0 : i32
    %c0_i32_0 = arith.constant 0 : i32
    %c0_i32_1 = arith.constant 0 : i32
    return %arg0, %arg1, %c0_i32, %c0_i32_0 : i32, i32, i32, i32
  }
}

</mosaic_0001>

<llo_original>
// kernel: hausdorff_dt_loss.1
$region0: #{hausdorff_dt_loss.1}
  #allocation0 [shape = 'u32[]', space=smem, size = 0x4, offset = 0x4, fixed_abs, tag = 'smem constant byte address 0x4 - core index']
  #allocation1 [shape = 'u32[144,128]{1,0:T(1,128)}', space=vmem, size = 0x12000, scoped, tag = 'internal scratch']
  #allocation2 [shape = 's32[1]{0}', space=sflag, size = 0x4, scoped, tag = 'scoped memory for hausdorff_dt_loss.1']
  #allocation3 [shape = 'u8[1024]{0}', space=smem, size = 0x400, scoped, tag = 'prefetched SMEM operand 0']
  %s0 = inlined_call_operand.vmem [shape: s32[2,4], index: 0, kind: input, shape index: {}]
  %s1 = inlined_call_operand.vmem [shape: f32[2,256,1], index: 1, kind: input, shape index: {}]
  %s2 = inlined_call_operand.vmem [shape: f32[2,256,1], index: 2, kind: input, shape index: {}]
  %s3 = inlined_call_operand.vmem [shape: f32[256,2], index: 3, kind: input, shape index: {}]
  %s4 = inlined_call_operand.vmem [shape: f32[2,2,128], index: 4, kind: input, shape index: {}]
  %s5 = inlined_call_operand.vmem [shape: f32[2,2,128], index: 5, kind: input, shape index: {}]
  %s6 = inlined_call_operand.vmem [shape: f32[2,128], index: 6, kind: input, shape index: {}]
  %s7 = inlined_call_operand.vmem [shape: f32[2,128], index: 7, kind: input, shape index: {}]
  %s8 = inlined_call_operand.vmem [shape: f32[2,4,1,128], index: 8, kind: output, shape index: {}]
  %s9 = sld [smem:[#allocation0]]
  $region61: #{hausdorff_dt_loss.1} parent=0
    _
  %s11 = ssub.s32 1, %s9
  %s12 = scalar_select 0, %s11, %s9
  %s13 = sshll.u32 %s0, 4
  %s14 = int_to_ptr.vmem [resolvable:$true] %s13
  %16 = dma.vmem_to_smem %s14, 32, [#allocation3], [#allocation2]
  %17 = dma.done [#allocation2], 32
  %18 = sfence
  loop: start=0, step=1, limit=10
  $region2: #{hausdorff_dt_loss.1} parent=0 // loop_pre_header
    _
  $region3: #{hausdorff_dt_loss.1} parent=0 // loop_header
    %s20 = sphi 0, %s24
    %p21 = scmp.ge.s32.totalorder %s20, 10
    %s27 = sphi 0, %s39
    %s28 = sphi 0, %s35
    %s29 = sphi 0, %s27
    %s30 = sphi 0, %s28
    %s31 = sphi 0, %s29
    %s32 = sphi 0, %s30
    %s44 = sphi 0, %s46
    %s47 = sphi 0, %s44
    %s48 = sphi 0, %s47
    %s64 = sphi 0, %s48
    %s72 = sphi 0, %s74
    %s75 = sphi 0, %s72
    %s76 = sphi 0, %s75
    %s92 = sphi 0, %s76
    %s98 = sphi 0, %s100
    %s101 = sphi 0, %s98
    %s102 = sphi 0, %s101
    %s118 = sphi 0, %s102
    %s124 = sphi 0, %s126
    %s127 = sphi 0, %s124
    %s128 = sphi 0, %s127
    %s144 = sphi 0, %s128
    %s150 = sphi 0, %s152
    %s153 = sphi 0, %s150
    %s154 = sphi 0, %s153
    %s170 = sphi 0, %s154
    %s174 = sphi 0, %s174
    %s176 = sphi 0, %s174
    %s177 = sphi 0, %s176
    %s191 = sphi 0, %s177
    %s195 = sphi 0, %s195
    %s197 = sphi 0, %s195
    %s198 = sphi 0, %s197
    %s212 = sphi 0, %s198
    %s220 = sphi 0, %s222
    %s223 = sphi 0, %s220
    %s224 = sphi 0, %s223
    %s240 = sphi 0, %s224
  $region4: #{hausdorff_dt_loss.1} parent=0 // loop_header_branch
    %23 = sbr.rel (%p21) target = $region8
  $region5: #{hausdorff_dt_loss.1} parent=0 // loop_body
    %s25 = ssub.s32 %s20, 1
    %s26 = ssub.s32 %s20, 2
    %s33 = sadd.s32 1, %s28
    %p34 = scmp.ge.s32.totalorder %s33, 4
    %s35 = scalar_select %p34, 0, %s33
    %s36 = sadd.s32 1, %s27
    %s37 = scalar_select %p34, %s36, %s27
    %p38 = scmp.ge.s32.totalorder %s37, 2
    %s39 = scalar_select %p38, 0, %s37
    %s40 = ssub.s32 %s27, %s39
    %s41 = ssub.s32 %s28, %s35
    %s42 = sor.u32 %s40, %s41
    %p43 = scmp.eq.s32.totalorder %s42, 0
    %s45 = sadd.s32 %s44, 1
    %s46 = scalar_select %p43, %s44, %s45
    %p49 = pneg %p43
    %p50 = scmp.eq.s32.totalorder %s20, 7
    %p51 = por %p49, %p50
    %p52 = scmp.ne.s32.totalorder %s44, %s47
    %p53 = scmp.eq.s32.totalorder %s20, 0
    %p54 = por %p52, %p53
    %p55 = scmp.ne.s32.totalorder %s44, %s47
    %p56 = scmp.eq.s32.totalorder %s25, 7
    %p57 = por %p55, %p56
    %p58 = scmp.ne.s32.totalorder %s47, %s48
    %p59 = scmp.eq.s32.totalorder %s25, 0
    %p60 = por %p58, %p59
    %p61 = scmp.ne.s32.totalorder %s47, %s48
    %p62 = scmp.eq.s32.totalorder %s26, 7
    %p63 = por %p61, %p62
    %p65 = scmp.ne.s32.totalorder %s48, %s64
    %p66 = scmp.eq.s32.totalorder %s26, 0
    %p67 = por %p65, %p66
    %s68 = ssub.s32 %s27, %s39
    %s69 = ssub.s32 %s28, %s35
    %s70 = sor.u32 %s68, %s69
    %p71 = scmp.eq.s32.totalorder %s70, 0
    %s73 = sadd.s32 %s72, 1
    %s74 = scalar_select %p71, %s72, %s73
    %p77 = pneg %p71
    %p78 = scmp.eq.s32.totalorder %s20, 7
    %p79 = por %p77, %p78
    %p80 = scmp.ne.s32.totalorder %s72, %s75
    %p81 = scmp.eq.s32.totalorder %s20, 0
    %p82 = por %p80, %p81
    %p83 = scmp.ne.s32.totalorder %s72, %s75
    %p84 = scmp.eq.s32.totalorder %s25, 7
    %p85 = por %p83, %p84
    %p86 = scmp.ne.s32.totalorder %s75, %s76
    %p87 = scmp.eq.s32.totalorder %s25, 0
    %p88 = por %p86, %p87
    %p89 = scmp.ne.s32.totalorder %s75, %s76
    %p90 = scmp.eq.s32.totalorder %s26, 7
    %p91 = por %p89, %p90
    %p93 = scmp.ne.s32.totalorder %s76, %s92
    %p94 = scmp.eq.s32.totalorder %s26, 0
    %p95 = por %p93, %p94
    %s96 = ssub.s32 %s28, %s35
    %p97 = scmp.eq.s32.totalorder %s96, 0
    %s99 = sadd.s32 %s98, 1
    %s100 = scalar_select %p97, %s98, %s99
    %p103 = pneg %p97
    %p104 = scmp.eq.s32.totalorder %s20, 7
    %p105 = por %p103, %p104
    %p106 = scmp.ne.s32.totalorder %s98, %s101
    %p107 = scmp.eq.s32.totalorder %s20, 0
    %p108 = por %p106, %p107
    %p109 = scmp.ne.s32.totalorder %s98, %s101
    %p110 = scmp.eq.s32.totalorder %s25, 7
    %p111 = por %p109, %p110
    %p112 = scmp.ne.s32.totalorder %s101, %s102
    %p113 = scmp.eq.s32.totalorder %s25, 0
    %p114 = por %p112, %p113
    %p115 = scmp.ne.s32.totalorder %s101, %s102
    %p116 = scmp.eq.s32.totalorder %s26, 7
    %p117 = por %p115, %p116
    %p119 = scmp.ne.s32.totalorder %s102, %s118
    %p120 = scmp.eq.s32.totalorder %s26, 0
    %p121 = por %p119, %p120
    %s122 = ssub.s32 %s27, %s39
    %p123 = scmp.eq.s32.totalorder %s122, 0
    %s125 = sadd.s32 %s124, 1
    %s126 = scalar_select %p123, %s124, %s125
    %p129 = pneg %p123
    %p130 = scmp.eq.s32.totalorder %s20, 7
    %p131 = por %p129, %p130
    %p132 = scmp.ne.s32.totalorder %s124, %s127
    %p133 = scmp.eq.s32.totalorder %s20, 0
    %p134 = por %p132, %p133
    %p135 = scmp.ne.s32.totalorder %s124, %s127
    %p136 = scmp.eq.s32.totalorder %s25, 7
    %p137 = por %p135, %p136
    %p138 = scmp.ne.s32.totalorder %s127, %s128
    %p139 = scmp.eq.s32.totalorder %s25, 0
    %p140 = por %p138, %p139
    %p141 = scmp.ne.s32.totalorder %s127, %s128
    %p142 = scmp.eq.s32.totalorder %s26, 7
    %p143 = por %p141, %p142
    %p145 = scmp.ne.s32.totalorder %s128, %s144
    %p146 = scmp.eq.s32.totalorder %s26, 0
    %p147 = por %p145, %p146
    %s148 = ssub.s32 %s27, %s39
    %p149 = scmp.eq.s32.totalorder %s148, 0
    %s151 = sadd.s32 %s150, 1
    %s152 = scalar_select %p149, %s150, %s151
    %p155 = pneg %p149
    %p156 = scmp.eq.s32.totalorder %s20, 7
    %p157 = por %p155, %p156
    %p158 = scmp.ne.s32.totalorder %s150, %s153
    %p159 = scmp.eq.s32.totalorder %s20, 0
    %p160 = por %p158, %p159
    %p161 = scmp.ne.s32.totalorder %s150, %s153
    %p162 = scmp.eq.s32.totalorder %s25, 7
    %p163 = por %p161, %p162
    %p164 = scmp.ne.s32.totalorder %s153, %s154
    %p165 = scmp.eq.s32.totalorder %s25, 0
    %p166 = por %p164, %p165
    %p167 = scmp.ne.s32.totalorder %s153, %s154
    %p168 = scmp.eq.s32.totalorder %s26, 7
    %p169 = por %p167, %p168
    %p171 = scmp.ne.s32.totalorder %s154, %s170
    %p172 = scmp.eq.s32.totalorder %s26, 0
    %p173 = por %p171, %p172
    %s175 = sadd.s32 %s174, 1
    %p178 = scmp.eq.s32.totalorder %s20, 7
    %p179 = scmp.ne.s32.totalorder %s174, %s176
    %p180 = scmp.eq.s32.totalorder %s20, 0
    %p181 = por %p179, %p180
    %p182 = scmp.ne.s32.totalorder %s174, %s176
    %p183 = scmp.eq.s32.totalorder %s25, 7
    %p184 = por %p182, %p183
    %p185 = scmp.ne.s32.totalorder %s176, %s177
    %p186 = scmp.eq.s32.totalorder %s25, 0
    %p187 = por %p185, %p186
    %p188 = scmp.ne.s32.totalorder %s176, %s177
    %p189 = scmp.eq.s32.totalorder %s26, 7
    %p190 = por %p188, %p189
    %p192 = scmp.ne.s32.totalorder %s177, %s191
    %p193 = scmp.eq.s32.totalorder %s26, 0
    %p194 = por %p192, %p193
    %s196 = sadd.s32 %s195, 1
    %p199 = scmp.eq.s32.totalorder %s20, 7
    %p200 = scmp.ne.s32.totalorder %s195, %s197
    %p201 = scmp.eq.s32.totalorder %s20, 0
    %p202 = por %p200, %p201
    %p203 = scmp.ne.s32.totalorder %s195, %s197
    %p204 = scmp.eq.s32.totalorder %s25, 7
    %p205 = por %p203, %p204
    %p206 = scmp.ne.s32.totalorder %s197, %s198
    %p207 = scmp.eq.s32.totalorder %s25, 0
    %p208 = por %p206, %p207
    %p209 = scmp.ne.s32.totalorder %s197, %s198
    %p210 = scmp.eq.s32.totalorder %s26, 7
    %p211 = por %p209, %p210
    %p213 = scmp.ne.s32.totalorder %s198, %s212
    %p214 = scmp.eq.s32.totalorder %s26, 0
    %p215 = por %p213, %p214
    %s216 = ssub.s32 %s27, %s39
    %s217 = ssub.s32 %s28, %s35
    %s218 = sor.u32 %s216, %s217
    %p219 = scmp.eq.s32.totalorder %s218, 0
    %s221 = sadd.s32 %s220, 1
    %s222 = scalar_select %p219, %s220, %s221
    %p225 = pneg %p219
    %p226 = scmp.eq.s32.totalorder %s20, 7
    %p227 = por %p225, %p226
    %p228 = scmp.ne.s32.totalorder %s220, %s223
    %p229 = scmp.eq.s32.totalorder %s20, 0
    %p230 = por %p228, %p229
    %p231 = scmp.ne.s32.totalorder %s220, %s223
    %p232 = scmp.eq.s32.totalorder %s25, 7
    %p233 = por %p231, %p232
    %p234 = scmp.ne.s32.totalorder %s223, %s224
    %p235 = scmp.eq.s32.totalorder %s25, 0
    %p236 = por %p234, %p235
    %p237 = scmp.ne.s32.totalorder %s223, %s224
    %p238 = scmp.eq.s32.totalorder %s26, 7
    %p239 = por %p237, %p238
    %p241 = scmp.ne.s32.totalorder %s224, %s240
    %p242 = scmp.eq.s32.totalorder %s26, 0
    %p243 = por %p241, %p242
    %p244 = scmp.le.s32.totalorder 1, %s20
    %p245 = scmp.lt.s32.totalorder %s20, 9
    %p246 = pnand %p244, %p245
    %p247 = pneg %p246
    // Predicated region
    $region9: #{hausdorff_dt_loss.1} parent=5 // pred_check
      _
    $region10: #{hausdorff_dt_loss.1} parent=5 // pred_check_branch
      %249 = sbr.rel (%p246) target = $region12
    $region11: #{hausdorff_dt_loss.1} parent=5 // pred_region
      %s250 = ssub.s32 %s20, 1
      // Predicated region
      $region13: #{hausdorff_dt_loss.1} parent=11 // pred_check
        %p251 = pneg %p187
      $region14: #{hausdorff_dt_loss.1} parent=11 // pred_check_branch
        %253 = sbr.rel (%p251) target = $region16
      $region15: #{hausdorff_dt_loss.1} parent=11 // pred_region
        _
      $region16: #{hausdorff_dt_loss.1} parent=11 // pred_fallthru
        _
      // Predicated region
      $region17: #{hausdorff_dt_loss.1} parent=11 // pred_check
        %p254 = pneg %p208
      $region18: #{hausdorff_dt_loss.1} parent=11 // pred_check_branch
        %256 = sbr.rel (%p254) target = $region20
      $region19: #{hausdorff_dt_loss.1} parent=11 // pred_region
        _
      $region20: #{hausdorff_dt_loss.1} parent=11 // pred_fallthru
        _
    $region12: #{hausdorff_dt_loss.1} parent=5 // pred_fallthru
      _
    %p257 = scmp.lt.s32.totalorder %s20, 8
    // Predicated region
    $region21: #{hausdorff_dt_loss.1} parent=5 // pred_check
      %p258 = pneg %p257
    $region22: #{hausdorff_dt_loss.1} parent=5 // pred_check_branch
      %260 = sbr.rel (%p258) target = $region24
    $region23: #{hausdorff_dt_loss.1} parent=5 // pred_region
      // Predicated region
      $region25: #{hausdorff_dt_loss.1} parent=23 // pred_check
        %p261 = pneg %p54
      $region26: #{hausdorff_dt_loss.1} parent=23 // pred_check_branch
        %263 = sbr.rel (%p261) target = $region28
      $region27: #{hausdorff_dt_loss.1} parent=23 // pred_region
        %s264 = smul.u32 8, %s28
        %p265 = scmp.lt.s32.totalorder %s27, 1
        %s266 = scalar_select %p265, %s27, 1
        %p267 = scmp.lt.s32.totalorder %s264, 31
        %s268 = scalar_select %p267, %s264, 31
        %s269 = smul.addr %s266, 32
        %s270 = sadd.s32 %s268, %s269
        %s271 = smul.addr %s270, 8
        %s272 = scalar_lea.vmem %s1, %s271
        %s273 = smul.u32 8, %s28
      $region28: #{hausdorff_dt_loss.1} parent=23 // pred_fallthru
        _
      // Predicated region
      $region29: #{hausdorff_dt_loss.1} parent=23 // pred_check
        %p274 = pneg %p82
      $region30: #{hausdorff_dt_loss.1} parent=23 // pred_check_branch
        %276 = sbr.rel (%p274) target = $region32
      $region31: #{hausdorff_dt_loss.1} parent=23 // pred_region
        %s277 = smul.u32 8, %s28
        %p278 = scmp.lt.s32.totalorder %s27, 1
        %s279 = scalar_select %p278, %s27, 1
        %p280 = scmp.lt.s32.totalorder %s277, 31
        %s281 = scalar_select %p280, %s277, 31
        %s282 = smul.addr %s279, 32
        %s283 = sadd.s32 %s281, %s282
        %s284 = smul.addr %s283, 8
        %s285 = scalar_lea.vmem %s2, %s284
        %s286 = smul.u32 8, %s28
      $region32: #{hausdorff_dt_loss.1} parent=23 // pred_fallthru
        _
      // Predicated region
      $region33: #{hausdorff_dt_loss.1} parent=23 // pred_check
        %p287 = pneg %p108
      $region34: #{hausdorff_dt_loss.1} parent=23 // pred_check_branch
        %289 = sbr.rel (%p287) target = $region36
      $region35: #{hausdorff_dt_loss.1} parent=23 // pred_region
        %s290 = smul.u32 8, %s28
        %p291 = scmp.lt.s32.totalorder %s290, 31
        %s292 = scalar_select %p291, %s290, 31
        %s293 = smul.addr %s292, 8
        %s294 = scalar_lea.vmem %s3, %s293
        %s295 = smul.u32 8, %s28
      $region36: #{hausdorff_dt_loss.1} parent=23 // pred_fallthru
        _
      // Predicated region
      $region37: #{hausdorff_dt_loss.1} parent=23 // pred_check
        %p296 = pneg %p134
      $region38: #{hausdorff_dt_loss.1} parent=23 // pred_check_branch
        %298 = sbr.rel (%p296) target = $region40
      $region39: #{hausdorff_dt_loss.1} parent=23 // pred_region
        %p299 = scmp.lt.s32.totalorder %s27, 1
        %s300 = scalar_select %p299, %s27, 1
        %s301 = smul.addr %s300, 2
        %s302 = scalar_lea.vmem %s4, %s301
      $region40: #{hausdorff_dt_loss.1} parent=23 // pred_fallthru
        _
      // Predicated region
      $region41: #{hausdorff_dt_loss.1} parent=23 // pred_check
        %p303 = pneg %p160
      $region42: #{hausdorff_dt_loss.1} parent=23 // pred_check_branch
        %305 = sbr.rel (%p303) target = $region44
      $region43: #{hausdorff_dt_loss.1} parent=23 // pred_region
        %p306 = scmp.lt.s32.totalorder %s27, 1
        %s307 = scalar_select %p306, %s27, 1
        %s308 = smul.addr %s307, 2
        %s309 = scalar_lea.vmem %s5, %s308
      $region44: #{hausdorff_dt_loss.1} parent=23 // pred_fallthru
        _
    $region24: #{hausdorff_dt_loss.1} parent=5 // pred_fallthru
      _
    %p310 = scmp.le.s32.totalorder 1, %s20
    %p311 = scmp.lt.s32.totalorder %s20, 9
    %p312 = pnand %p310, %p311
    %p313 = pneg %p312
    // Predicated region
    $region45: #{hausdorff_dt_loss.1} parent=5 // pred_check
      _
    $region46: #{hausdorff_dt_loss.1} parent=5 // pred_check_branch
      %315 = sbr.rel (%p312) target = $region48
    $region47: #{hausdorff_dt_loss.1} parent=5 // pred_region
      %s316 = ssub.s32 %s20, 1
      %s317 = smul.u32 8, %s30
      %p318 = scmp.lt.s32.totalorder %s29, 1
      %s319 = scalar_select %p318, %s29, 1
      %p320 = scmp.lt.s32.totalorder %s317, 31
      %s321 = scalar_select %p320, %s317, 31
      %s322 = smul.addr %s319, 32
      %s323 = sadd.s32 %s321, %s322
      %s324 = smul.addr %s323, 8
      %s325 = scalar_lea.vmem %s1, %s324
      %p326 = pneg %p60
      %p327 = pneg %p57
      %s328 = smul.u32 8, %s30
      %p329 = scmp.lt.s32.totalorder %s29, 1
      %s330 = scalar_select %p329, %s29, 1
      %p331 = scmp.lt.s32.totalorder %s328, 31
      %s332 = scalar_select %p331, %s328, 31
      %s333 = smul.addr %s330, 32
      %s334 = sadd.s32 %s332, %s333
      %s335 = smul.addr %s334, 8
      %s336 = scalar_lea.vmem %s2, %s335
      %p337 = pneg %p88
      %p338 = pneg %p85
      %s339 = smul.u32 8, %s30
      %p340 = scmp.lt.s32.totalorder %s339, 31
      %s341 = scalar_select %p340, %s339, 31
      %s342 = smul.addr %s341, 8
      %s343 = scalar_lea.vmem %s3, %s342
      %p344 = pneg %p114
      %p345 = pneg %p111
      %p346 = scmp.lt.s32.totalorder %s29, 1
      %s347 = scalar_select %p346, %s29, 1
      %s348 = smul.addr %s347, 2
      %s349 = scalar_lea.vmem %s4, %s348
      %p350 = pneg %p140
      %p351 = pneg %p137
      %p352 = scmp.lt.s32.totalorder %s29, 1
      %s353 = scalar_select %p352, %s29, 1
      %s354 = smul.addr %s353, 2
      %s355 = scalar_lea.vmem %s5, %s354
      %p356 = pneg %p166
      %p357 = pneg %p163
      %p358 = pneg %p187
      %p359 = pneg %p184
      %p360 = pneg %p208
      %p361 = pneg %p205
      %p362 = pneg %p236
      %p363 = pneg %p233
      %p364 = scmp.lt.s32.totalorder %s29, 1
      %s365 = scalar_select %p364, %s29, 1
      %p366 = scmp.lt.s32.totalorder %s30, 3
      %s367 = scalar_select %p366, %s30, 3
      %s368 = smul.addr %s365, 4
      %s369 = sadd.s32 %s367, %s368
      %s370 = scalar_lea.vmem %s8, %s369
      %s371 = smul.u32 8, %s30
      %p372 = scmp.lt.s32.totalorder %s29, 1
      %s373 = scalar_select %p372, %s29, 1
      %p374 = scmp.lt.s32.totalorder %s371, 31
      %s375 = scalar_select %p374, %s371, 31
      %s376 = smul.addr %s373, 32
      %s377 = sadd.s32 %s375, %s376
      %s378 = smul.addr %s377, 8
      %s379 = scalar_lea.vmem %s1, %s378
      %s380 = smul.u32 8, %s30
      %s381 = smul.u32 8, %s30
      %p382 = scmp.lt.s32.totalorder %s29, 1
      %s383 = scalar_select %p382, %s29, 1
      %p384 = scmp.lt.s32.totalorder %s381, 31
      %s385 = scalar_select %p384, %s381, 31
      %s386 = smul.addr %s383, 32
      %s387 = sadd.s32 %s385, %s386
      %s388 = smul.addr %s387, 8
      %s389 = scalar_lea.vmem %s2, %s388
      %s390 = smul.u32 8, %s30
      %s391 = smul.u32 8, %s30
      %p392 = scmp.lt.s32.totalorder %s391, 31
      %s393 = scalar_select %p392, %s391, 31
      %s394 = smul.addr %s393, 8
      %s395 = scalar_lea.vmem %s3, %s394
      %s396 = smul.u32 8, %s30
      %p397 = scmp.lt.s32.totalorder %s29, 1
      %s398 = scalar_select %p397, %s29, 1
      %s399 = smul.addr %s398, 2
      %s400 = scalar_lea.vmem %s4, %s399
      %p401 = scmp.lt.s32.totalorder %s29, 1
      %s402 = scalar_select %p401, %s29, 1
      %s403 = smul.addr %s402, 2
      %s404 = scalar_lea.vmem %s5, %s403
      %p405 = scmp.lt.s32.totalorder %s29, 1
      %s406 = scalar_select %p405, %s29, 1
      %p407 = scmp.lt.s32.totalorder %s30, 3
      %s408 = scalar_select %p407, %s30, 3
      %s409 = smul.addr %s406, 4
      %s410 = sadd.s32 %s408, %s409
      %s411 = scalar_lea.vmem %s8, %s410
      %v412 = vld [vmem:[%s379] sm:$0xff]
      %v413 = vld [vmem:[%s379 + $0x8] sm:$0xff]
      %v414 = vld [vmem:[%s379 + $0x10] sm:$0xff]
      %v415 = vld [vmem:[%s379 + $0x18] sm:$0xff]
      %v416 = vld [vmem:[%s379 + $0x20] sm:$0xff]
      %v417 = vld [vmem:[%s379 + $0x28] sm:$0xff]
      %v418 = vld [vmem:[%s379 + $0x30] sm:$0xff]
      %v419 = vld [vmem:[%s379 + $0x38] sm:$0xff]
      %v420 = vld [vmem:[%s389] sm:$0xff]
      %v421 = vld [vmem:[%s389 + $0x8] sm:$0xff]
      %v422 = vld [vmem:[%s389 + $0x10] sm:$0xff]
      %v423 = vld [vmem:[%s389 + $0x18] sm:$0xff]
      %v424 = vld [vmem:[%s389 + $0x20] sm:$0xff]
      %v425 = vld [vmem:[%s389 + $0x28] sm:$0xff]
      %v426 = vld [vmem:[%s389 + $0x30] sm:$0xff]
      %v427 = vld [vmem:[%s389 + $0x38] sm:$0xff]
      %vm428 = vcmp.gt.f32.partialorder %v412, 0.5
      %vm429 = vcmp.gt.f32.partialorder %v413, 0.5
      %vm430 = vcmp.gt.f32.partialorder %v414, 0.5
      %vm431 = vcmp.gt.f32.partialorder %v415, 0.5
      %vm432 = vcmp.gt.f32.partialorder %v416, 0.5
      %vm433 = vcmp.gt.f32.partialorder %v417, 0.5
      %vm434 = vcmp.gt.f32.partialorder %v418, 0.5
      %vm435 = vcmp.gt.f32.partialorder %v419, 0.5
      %vm436 = vcmp.gt.f32.partialorder %v420, 0.5
      %vm437 = vcmp.gt.f32.partialorder %v421, 0.5
      %vm438 = vcmp.gt.f32.partialorder %v422, 0.5
      %vm439 = vcmp.gt.f32.partialorder %v423, 0.5
      %vm440 = vcmp.gt.f32.partialorder %v424, 0.5
      %vm441 = vcmp.gt.f32.partialorder %v425, 0.5
      %vm442 = vcmp.gt.f32.partialorder %v426, 0.5
      %vm443 = vcmp.gt.f32.partialorder %v427, 0.5
      %v444 = vld [vmem:[%s395] sm:$0xff]
      %v445 = vld [vmem:[%s395 + $0x8] sm:$0xff]
      %v446 = vld [vmem:[%s395 + $0x10] sm:$0xff]
      %v447 = vld [vmem:[%s395 + $0x18] sm:$0xff]
      %v448 = vld [vmem:[%s395 + $0x20] sm:$0xff]
      %v449 = vld [vmem:[%s395 + $0x28] sm:$0xff]
      %v450 = vld [vmem:[%s395 + $0x30] sm:$0xff]
      %v451 = vld [vmem:[%s395 + $0x38] sm:$0xff]
      %453 = vset.pattern.permute.xlu0 0
      %454 = vperm.xlu0 %453, %v444
      %v455 = vpop.permute.xlu0 %454
      %458 = vset.pattern.permute.xlu0 0
      %459 = vperm.xlu0 %458, %v445
      %v460 = vpop.permute.xlu0 %459
      %463 = vset.pattern.permute.xlu0 0
      %464 = vperm.xlu0 %463, %v446
      %v465 = vpop.permute.xlu0 %464
      %468 = vset.pattern.permute.xlu0 0
      %469 = vperm.xlu0 %468, %v447
      %v470 = vpop.permute.xlu0 %469
      %473 = vset.pattern.permute.xlu0 0
      %474 = vperm.xlu0 %473, %v448
      %v475 = vpop.permute.xlu0 %474
      %478 = vset.pattern.permute.xlu0 0
      %479 = vperm.xlu0 %478, %v449
      %v480 = vpop.permute.xlu0 %479
      %483 = vset.pattern.permute.xlu0 0
      %484 = vperm.xlu0 %483, %v450
      %v485 = vpop.permute.xlu0 %484
      %488 = vset.pattern.permute.xlu0 0
      %489 = vperm.xlu0 %488, %v451
      %v490 = vpop.permute.xlu0 %489
      %492 = vset.pattern.permute.xlu0 1
      %493 = vperm.xlu0 %492, %v444
      %v494 = vpop.permute.xlu0 %493
      %496 = vset.pattern.permute.xlu0 1
      %497 = vperm.xlu0 %496, %v445
      %v498 = vpop.permute.xlu0 %497
      %500 = vset.pattern.permute.xlu0 1
      %501 = vperm.xlu0 %500, %v446
      %v502 = vpop.permute.xlu0 %501
      %504 = vset.pattern.permute.xlu0 1
      %505 = vperm.xlu0 %504, %v447
      %v506 = vpop.permute.xlu0 %505
      %508 = vset.pattern.permute.xlu0 1
      %509 = vperm.xlu0 %508, %v448
      %v510 = vpop.permute.xlu0 %509
      %512 = vset.pattern.permute.xlu0 1
      %513 = vperm.xlu0 %512, %v449
      %v514 = vpop.permute.xlu0 %513
      %516 = vset.pattern.permute.xlu0 1
      %517 = vperm.xlu0 %516, %v450
      %v518 = vpop.permute.xlu0 %517
      %520 = vset.pattern.permute.xlu0 1
      %521 = vperm.xlu0 %520, %v451
      %v522 = vpop.permute.xlu0 %521
      %v524 = vld [vmem:[%s6] sm:$0x1]
      %v525 = vld [vmem:[%s7] sm:$0x1]
      %v526 = vld [vmem:[%s400] sm:$0x1]
      %v527 = vld [vmem:[%s404] sm:$0x1]
      %v528 = vlaneseq
      %v529 = vshrl.u32 %v528, 7
      %v530 = vsub.s32 0, %v529
      %v531 = vrot.slane %v524, %v530
      %v532 = vsub.f32 %v531, %v455
      %v533 = vsub.f32 %v531, %v460
      %v534 = vsub.f32 %v531, %v465
      %v535 = vsub.f32 %v531, %v470
      %v536 = vsub.f32 %v531, %v475
      %v537 = vsub.f32 %v531, %v480
      %v538 = vsub.f32 %v531, %v485
      %v539 = vsub.f32 %v531, %v490
      %v540 = vlaneseq
      %v541 = vshrl.u32 %v540, 7
      %v542 = vsub.s32 0, %v541
      %v543 = vrot.slane %v525, %v542
      %v544 = vsub.f32 %v543, %v494
      %v545 = vsub.f32 %v543, %v498
      %v546 = vsub.f32 %v543, %v502
      %v547 = vsub.f32 %v543, %v506
      %v548 = vsub.f32 %v543, %v510
      %v549 = vsub.f32 %v543, %v514
      %v550 = vsub.f32 %v543, %v518
      %v551 = vsub.f32 %v543, %v522
      %v552 = vmul.f32 %v532, %v532
      %v553 = vmul.f32 %v533, %v533
      %v554 = vmul.f32 %v534, %v534
      %v555 = vmul.f32 %v535, %v535
      %v556 = vmul.f32 %v536, %v536
      %v557 = vmul.f32 %v537, %v537
      %v558 = vmul.f32 %v538, %v538
      %v559 = vmul.f32 %v539, %v539
      %v560 = vmul.f32 %v544, %v544
      %v561 = vmul.f32 %v545, %v545
      %v562 = vmul.f32 %v546, %v546
      %v563 = vmul.f32 %v547, %v547
      %v564 = vmul.f32 %v548, %v548
      %v565 = vmul.f32 %v549, %v549
      %v566 = vmul.f32 %v550, %v550
      %v567 = vmul.f32 %v551, %v551
      %v568 = vadd.f32 %v552, %v560
      %v569 = vadd.f32 %v553, %v561
      %v570 = vadd.f32 %v554, %v562
      %v571 = vadd.f32 %v555, %v563
      %v572 = vadd.f32 %v556, %v564
      %v573 = vadd.f32 %v557, %v565
      %v574 = vadd.f32 %v558, %v566
      %v575 = vadd.f32 %v559, %v567
      %vm576 = vcmp.gt.f32.partialorder %v526, 0.5
      %v577 = vsel %vm576, 1, 0
      %v578 = vlaneseq
      %v579 = vshrl.u32 %v578, 7
      %v580 = vsub.s32 0, %v579
      %v581 = vrot.slane %v577, %v580
      %vm582 = vcmp.eq.s32.totalorder %v581, 1
      %v583 = vsel %vm428, 1, 0
      %v584 = vsel %vm429, 1, 0
      %v585 = vsel %vm430, 1, 0
      %v586 = vsel %vm431, 1, 0
      %v587 = vsel %vm432, 1, 0
      %v588 = vsel %vm433, 1, 0
      %v589 = vsel %vm434, 1, 0
      %v590 = vsel %vm435, 1, 0
      %591 = vset.pattern.permute.xlu0 0
      %592 = vperm.xlu0 %591, %v583
      %v593 = vpop.permute.xlu0 %592
      %594 = vset.pattern.permute.xlu0 0
      %595 = vperm.xlu0 %594, %v584
      %v596 = vpop.permute.xlu0 %595
      %597 = vset.pattern.permute.xlu0 0
      %598 = vperm.xlu0 %597, %v585
      %v599 = vpop.permute.xlu0 %598
      %600 = vset.pattern.permute.xlu0 0
      %601 = vperm.xlu0 %600, %v586
      %v602 = vpop.permute.xlu0 %601
      %603 = vset.pattern.permute.xlu0 0
      %604 = vperm.xlu0 %603, %v587
      %v605 = vpop.permute.xlu0 %604
      %606 = vset.pattern.permute.xlu0 0
      %607 = vperm.xlu0 %606, %v588
      %v608 = vpop.permute.xlu0 %607
      %609 = vset.pattern.permute.xlu0 0
      %610 = vperm.xlu0 %609, %v589
      %v611 = vpop.permute.xlu0 %610
      %612 = vset.pattern.permute.xlu0 0
      %613 = vperm.xlu0 %612, %v590
      %v614 = vpop.permute.xlu0 %613
      %vm615 = vcmp.eq.s32.totalorder %v593, 1
      %vm616 = vcmp.eq.s32.totalorder %v596, 1
      %vm617 = vcmp.eq.s32.totalorder %v599, 1
      %vm618 = vcmp.eq.s32.totalorder %v602, 1
      %vm619 = vcmp.eq.s32.totalorder %v605, 1
      %vm620 = vcmp.eq.s32.totalorder %v608, 1
      %vm621 = vcmp.eq.s32.totalorder %v611, 1
      %vm622 = vcmp.eq.s32.totalorder %v614, 1
      %vm623 = vmxor %vm582, %vm615
      %vm624 = vmxor %vm582, %vm616
      %vm625 = vmxor %vm582, %vm617
      %vm626 = vmxor %vm582, %vm618
      %vm627 = vmxor %vm582, %vm619
      %vm628 = vmxor %vm582, %vm620
      %vm629 = vmxor %vm582, %vm621
      %vm630 = vmxor %vm582, %vm622
      %vm631 = vcmp.gt.f32.partialorder %v527, 0.5
      %v632 = vsel %vm631, 1, 0
      %v633 = vlaneseq
      %v634 = vshrl.u32 %v633, 7
      %v635 = vsub.s32 0, %v634
      %v636 = vrot.slane %v632, %v635
      %vm637 = vcmp.eq.s32.totalorder %v636, 1
      %v638 = vsel %vm436, 1, 0
      %v639 = vsel %vm437, 1, 0
      %v640 = vsel %vm438, 1, 0
      %v641 = vsel %vm439, 1, 0
      %v642 = vsel %vm440, 1, 0
      %v643 = vsel %vm441, 1, 0
      %v644 = vsel %vm442, 1, 0
      %v645 = vsel %vm443, 1, 0
      %646 = vset.pattern.permute.xlu0 0
      %647 = vperm.xlu0 %646, %v638
      %v648 = vpop.permute.xlu0 %647
      %649 = vset.pattern.permute.xlu0 0
      %650 = vperm.xlu0 %649, %v639
      %v651 = vpop.permute.xlu0 %650
      %652 = vset.pattern.permute.xlu0 0
      %653 = vperm.xlu0 %652, %v640
      %v654 = vpop.permute.xlu0 %653
      %655 = vset.pattern.permute.xlu0 0
      %656 = vperm.xlu0 %655, %v641
      %v657 = vpop.permute.xlu0 %656
      %658 = vset.pattern.permute.xlu0 0
      %659 = vperm.xlu0 %658, %v642
      %v660 = vpop.permute.xlu0 %659
      %661 = vset.pattern.permute.xlu0 0
      %662 = vperm.xlu0 %661, %v643
      %v663 = vpop.permute.xlu0 %662
      %664 = vset.pattern.permute.xlu0 0
      %665 = vperm.xlu0 %664, %v644
      %v666 = vpop.permute.xlu0 %665
      %667 = vset.pattern.permute.xlu0 0
      %668 = vperm.xlu0 %667, %v645
      %v669 = vpop.permute.xlu0 %668
      %vm670 = vcmp.eq.s32.totalorder %v648, 1
      %vm671 = vcmp.eq.s32.totalorder %v651, 1
      %vm672 = vcmp.eq.s32.totalorder %v654, 1
      %vm673 = vcmp.eq.s32.totalorder %v657, 1
      %vm674 = vcmp.eq.s32.totalorder %v660, 1
      %vm675 = vcmp.eq.s32.totalorder %v663, 1
      %vm676 = vcmp.eq.s32.totalorder %v666, 1
      %vm677 = vcmp.eq.s32.totalorder %v669, 1
      %vm678 = vmxor %vm637, %vm670
      %vm679 = vmxor %vm637, %vm671
      %vm680 = vmxor %vm637, %vm672
      %vm681 = vmxor %vm637, %vm673
      %vm682 = vmxor %vm637, %vm674
      %vm683 = vmxor %vm637, %vm675
      %vm684 = vmxor %vm637, %vm676
      %vm685 = vmxor %vm637, %vm677
      %v686 = vsel %vm623, %v568, 1e+30
      %v687 = vsel %vm624, %v569, 1e+30
      %v688 = vsel %vm625, %v570, 1e+30
      %v689 = vsel %vm626, %v571, 1e+30
      %v690 = vsel %vm627, %v572, 1e+30
      %v691 = vsel %vm628, %v573, 1e+30
      %v692 = vsel %vm629, %v574, 1e+30
      %v693 = vsel %vm630, %v575, 1e+30
      %v694 = vmin.f32 %v686, 1e+30
      %v695 = vmin.f32 %v687, 1e+30
      %v696 = vmin.f32 %v688, 1e+30
      %v697 = vmin.f32 %v689, 1e+30
      %v698 = vmin.f32 %v690, 1e+30
      %v699 = vmin.f32 %v691, 1e+30
      %v700 = vmin.f32 %v692, 1e+30
      %v701 = vmin.f32 %v693, 1e+30
      %v702 = vsel %vm678, %v568, 1e+30
      %v703 = vsel %vm679, %v569, 1e+30
      %v704 = vsel %vm680, %v570, 1e+30
      %v705 = vsel %vm681, %v571, 1e+30
      %v706 = vsel %vm682, %v572, 1e+30
      %v707 = vsel %vm683, %v573, 1e+30
      %v708 = vsel %vm684, %v574, 1e+30
      %v709 = vsel %vm685, %v575, 1e+30
      %v710 = vmin.f32 %v702, 1e+30
      %v711 = vmin.f32 %v703, 1e+30
      %v712 = vmin.f32 %v704, 1e+30
      %v713 = vmin.f32 %v705, 1e+30
      %v714 = vmin.f32 %v706, 1e+30
      %v715 = vmin.f32 %v707, 1e+30
      %v716 = vmin.f32 %v708, 1e+30
      %v717 = vmin.f32 %v709, 1e+30
      %v718 = vld [vmem:[%s6 + $0x1] sm:$0x1]
      %v719 = vld [vmem:[%s7 + $0x1] sm:$0x1]
      %v720 = vld [vmem:[%s400 + $0x1] sm:$0x1]
      %v721 = vld [vmem:[%s404 + $0x1] sm:$0x1]
      %v722 = vlaneseq
      %v723 = vshrl.u32 %v722, 7
      %v724 = vsub.s32 0, %v723
      %v725 = vrot.slane %v718, %v724
      %v726 = vsub.f32 %v725, %v455
      %v727 = vsub.f32 %v725, %v460
      %v728 = vsub.f32 %v725, %v465
      %v729 = vsub.f32 %v725, %v470
      %v730 = vsub.f32 %v725, %v475
      %v731 = vsub.f32 %v725, %v480
      %v732 = vsub.f32 %v725, %v485
      %v733 = vsub.f32 %v725, %v490
      %v734 = vlaneseq
      %v735 = vshrl.u32 %v734, 7
      %v736 = vsub.s32 0, %v735
      %v737 = vrot.slane %v719, %v736
      %v738 = vsub.f32 %v737, %v494
      %v739 = vsub.f32 %v737, %v498
      %v740 = vsub.f32 %v737, %v502
      %v741 = vsub.f32 %v737, %v506
      %v742 = vsub.f32 %v737, %v510
      %v743 = vsub.f32 %v737, %v514
      %v744 = vsub.f32 %v737, %v518
      %v745 = vsub.f32 %v737, %v522
      %v746 = vmul.f32 %v726, %v726
      %v747 = vmul.f32 %v727, %v727
      %v748 = vmul.f32 %v728, %v728
      %v749 = vmul.f32 %v729, %v729
      %v750 = vmul.f32 %v730, %v730
      %v751 = vmul.f32 %v731, %v731
      %v752 = vmul.f32 %v732, %v732
      %v753 = vmul.f32 %v733, %v733
      %v754 = vmul.f32 %v738, %v738
      %v755 = vmul.f32 %v739, %v739
      %v756 = vmul.f32 %v740, %v740
      %v757 = vmul.f32 %v741, %v741
      %v758 = vmul.f32 %v742, %v742
      %v759 = vmul.f32 %v743, %v743
      %v760 = vmul.f32 %v744, %v744
      %v761 = vmul.f32 %v745, %v745
      %v762 = vadd.f32 %v746, %v754
      %v763 = vadd.f32 %v747, %v755
      %v764 = vadd.f32 %v748, %v756
      %v765 = vadd.f32 %v749, %v757
      %v766 = vadd.f32 %v750, %v758
      %v767 = vadd.f32 %v751, %v759
      %v768 = vadd.f32 %v752, %v760
      %v769 = vadd.f32 %v753, %v761
      %vm770 = vcmp.gt.f32.partialorder %v720, 0.5
      %v771 = vsel %vm770, 1, 0
      %v772 = vlaneseq
      %v773 = vshrl.u32 %v772, 7
      %v774 = vsub.s32 0, %v773
      %v775 = vrot.slane %v771, %v774
      %vm776 = vcmp.eq.s32.totalorder %v775, 1
      %vm777 = vmxor %vm776, %vm615
      %vm778 = vmxor %vm776, %vm616
      %vm779 = vmxor %vm776, %vm617
      %vm780 = vmxor %vm776, %vm618
      %vm781 = vmxor %vm776, %vm619
      %vm782 = vmxor %vm776, %vm620
      %vm783 = vmxor %vm776, %vm621
      %vm784 = vmxor %vm776, %vm622
      %vm785 = vcmp.gt.f32.partialorder %v721, 0.5
      %v786 = vsel %vm785, 1, 0
      %v787 = vlaneseq
      %v788 = vshrl.u32 %v787, 7
      %v789 = vsub.s32 0, %v788
      %v790 = vrot.slane %v786, %v789
      %vm791 = vcmp.eq.s32.totalorder %v790, 1
      %vm792 = vmxor %vm791, %vm670
      %vm793 = vmxor %vm791, %vm671
      %vm794 = vmxor %vm791, %vm672
      %vm795 = vmxor %vm791, %vm673
      %vm796 = vmxor %vm791, %vm674
      %vm797 = vmxor %vm791, %vm675
      %vm798 = vmxor %vm791, %vm676
      %vm799 = vmxor %vm791, %vm677
      %v800 = vsel %vm777, %v762, 1e+30
      %v801 = vsel %vm778, %v763, 1e+30
      %v802 = vsel %vm779, %v764, 1e+30
      %v803 = vsel %vm780, %v765, 1e+30
      %v804 = vsel %vm781, %v766, 1e+30
      %v805 = vsel %vm782, %v767, 1e+30
      %v806 = vsel %vm783, %v768, 1e+30
      %v807 = vsel %vm784, %v769, 1e+30
      %v808 = vmin.f32 %v694, %v800
      %v809 = vmin.f32 %v695, %v801
      %v810 = vmin.f32 %v696, %v802
      %v811 = vmin.f32 %v697, %v803
      %v812 = vmin.f32 %v698, %v804
      %v813 = vmin.f32 %v699, %v805
      %v814 = vmin.f32 %v700, %v806
      %v815 = vmin.f32 %v701, %v807
      %v816 = vsel %vm792, %v762, 1e+30
      %v817 = vsel %vm793, %v763, 1e+30
      %v818 = vsel %vm794, %v764, 1e+30
      %v819 = vsel %vm795, %v765, 1e+30
      %v820 = vsel %vm796, %v766, 1e+30
      %v821 = vsel %vm797, %v767, 1e+30
      %v822 = vsel %vm798, %v768, 1e+30
      %v823 = vsel %vm799, %v769, 1e+30
      %v824 = vmin.f32 %v710, %v816
      %v825 = vmin.f32 %v711, %v817
      %v826 = vmin.f32 %v712, %v818
      %v827 = vmin.f32 %v713, %v819
      %v828 = vmin.f32 %v714, %v820
      %v829 = vmin.f32 %v715, %v821
      %v830 = vmin.f32 %v716, %v822
      %v831 = vmin.f32 %v717, %v823
      %832 = vmin.xlane.f32.xlu0 %v808
      %v833 = vpop.xlane.xlu0 %832
      %834 = vmin.xlane.f32.xlu0 %v809
      %v835 = vpop.xlane.xlu0 %834
      %836 = vmin.xlane.f32.xlu0 %v810
      %v837 = vpop.xlane.xlu0 %836
      %838 = vmin.xlane.f32.xlu0 %v811
      %v839 = vpop.xlane.xlu0 %838
      %840 = vmin.xlane.f32.xlu0 %v812
      %v841 = vpop.xlane.xlu0 %840
      %842 = vmin.xlane.f32.xlu0 %v813
      %v843 = vpop.xlane.xlu0 %842
      %844 = vmin.xlane.f32.xlu0 %v814
      %v845 = vpop.xlane.xlu0 %844
      %846 = vmin.xlane.f32.xlu0 %v815
      %v847 = vpop.xlane.xlu0 %846
      %848 = vmin.xlane.f32.xlu0 %v824
      %v849 = vpop.xlane.xlu0 %848
      %850 = vmin.xlane.f32.xlu0 %v825
      %v851 = vpop.xlane.xlu0 %850
      %852 = vmin.xlane.f32.xlu0 %v826
      %v853 = vpop.xlane.xlu0 %852
      %854 = vmin.xlane.f32.xlu0 %v827
      %v855 = vpop.xlane.xlu0 %854
      %856 = vmin.xlane.f32.xlu0 %v828
      %v857 = vpop.xlane.xlu0 %856
      %858 = vmin.xlane.f32.xlu0 %v829
      %v859 = vpop.xlane.xlu0 %858
      %860 = vmin.xlane.f32.xlu0 %v830
      %v861 = vpop.xlane.xlu0 %860
      %862 = vmin.xlane.f32.xlu0 %v831
      %v863 = vpop.xlane.xlu0 %862
      %s864 = smul.u32 %s29, 128
      %s865 = sld [smem:[#allocation3 + %s864]]
      %p866 = scmp.gt.s32.totalorder %s865, 0
      %s867 = sadd.s32 %s864, 1
      %s868 = sld [smem:[#allocation3 + %s867]]
      %p869 = scmp.gt.s32.totalorder %s868, 0
      %p870 = pnand %p866, %p869
      %p871 = pneg %p870
      %s872 = sadd.s32 %s864, 2
      %s873 = sld [smem:[#allocation3 + %s872]]
      %p874 = scmp.gt.s32.totalorder %s873, 0
      %s875 = sadd.s32 %s864, 3
      %s876 = sld [smem:[#allocation3 + %s875]]
      %p877 = scmp.gt.s32.totalorder %s876, 0
      %p878 = pnand %p874, %p877
      %p879 = pneg %p878
      %s880 = scalar_select %p871, 1, 0
      %v881 = vstv %s880
      %vm882 = vcmp.eq.s32.totalorder %v881, 1
      %v883 = vsel %vm882, %v833, 0.0
      %v884 = vsel %vm882, %v835, 0.0
      %v885 = vsel %vm882, %v837, 0.0
      %v886 = vsel %vm882, %v839, 0.0
      %v887 = vsel %vm882, %v841, 0.0
      %v888 = vsel %vm882, %v843, 0.0
      %v889 = vsel %vm882, %v845, 0.0
      %v890 = vsel %vm882, %v847, 0.0
      %s891 = scalar_select %p879, 1, 0
      %v892 = vstv %s891
      %vm893 = vcmp.eq.s32.totalorder %v892, 1
      %v894 = vsel %vm893, %v849, 0.0
      %v895 = vsel %vm893, %v851, 0.0
      %v896 = vsel %vm893, %v853, 0.0
      %v897 = vsel %vm893, %v855, 0.0
      %v898 = vsel %vm893, %v857, 0.0
      %v899 = vsel %vm893, %v859, 0.0
      %v900 = vsel %vm893, %v861, 0.0
      %v901 = vsel %vm893, %v863, 0.0
      %v902 = vadd.f32 %v883, %v894
      %v903 = vadd.f32 %v884, %v895
      %v904 = vadd.f32 %v885, %v896
      %v905 = vadd.f32 %v886, %v897
      %v906 = vadd.f32 %v887, %v898
      %v907 = vadd.f32 %v888, %v899
      %v908 = vadd.f32 %v889, %v900
      %v909 = vadd.f32 %v890, %v901
      %v910 = vsub.f32 %v412, %v420
      %v911 = vsub.f32 %v413, %v421
      %v912 = vsub.f32 %v414, %v422
      %v913 = vsub.f32 %v415, %v423
      %v914 = vsub.f32 %v416, %v424
      %v915 = vsub.f32 %v417, %v425
      %v916 = vsub.f32 %v418, %v426
      %v917 = vsub.f32 %v419, %v427
      %v918 = vmul.f32 %v910, %v910
      %v919 = vmul.f32 %v911, %v911
      %v920 = vmul.f32 %v912, %v912
      %v921 = vmul.f32 %v913, %v913
      %v922 = vmul.f32 %v914, %v914
      %v923 = vmul.f32 %v915, %v915
      %v924 = vmul.f32 %v916, %v916
      %v925 = vmul.f32 %v917, %v917
      %v926 = vmul.f32 %v918, %v902
      %v927 = vmul.f32 %v919, %v903
      %v928 = vmul.f32 %v920, %v904
      %v929 = vmul.f32 %v921, %v905
      %v930 = vmul.f32 %v922, %v906
      %v931 = vmul.f32 %v923, %v907
      %v932 = vmul.f32 %v924, %v908
      %v933 = vmul.f32 %v925, %v909
      %vm934 = vcmask 7168
      %v935 = vsel %vm934, %v926, 0.0
      %v936 = vsel %vm934, %v927, 0.0
      %v937 = vadd.f32 %v935, %v936
      %v938 = vsel %vm934, %v928, 0.0
      %v939 = vadd.f32 %v937, %v938
      %v940 = vsel %vm934, %v929, 0.0
      %v941 = vadd.f32 %v939, %v940
      %v942 = vsel %vm934, %v930, 0.0
      %v943 = vadd.f32 %v941, %v942
      %v944 = vsel %vm934, %v931, 0.0
      %v945 = vadd.f32 %v943, %v944
      %v946 = vsel %vm934, %v932, 0.0
      %v947 = vadd.f32 %v945, %v946
      %v948 = vsel %vm934, %v933, 0.0
      %v949 = vadd.f32 %v947, %v948
      %950 = vadd.xlane.f32.xlu0 %v949
      %v951 = vpop.xlane.xlu0 %950
      %v952 = vrot.slane %v951, 4
      %v953 = vadd.f32 %v951, %v952
      %v954 = vrot.slane %v953, 2
      %v955 = vadd.f32 %v953, %v954
      %v956 = vrot.slane %v955, 1
      %v957 = vadd.f32 %v955, %v956
      %s958 = vtos %v957
      %v959 = vstv %s958
      %960 = vst [vmem:[%s411] sm:$0x1] %v959
      %p961 = scmp.lt.s32.totalorder %s29, 1
      %s962 = scalar_select %p961, %s29, 1
      %p963 = scmp.lt.s32.totalorder %s30, 3
      %s964 = scalar_select %p963, %s30, 3
      %s965 = smul.addr %s962, 4
      %s966 = sadd.s32 %s964, %s965
      %s967 = scalar_lea.vmem %s8, %s966
      // Predicated region
      $region49: #{hausdorff_dt_loss.1} parent=47 // pred_check
        %p968 = pneg %p233
      $region50: #{hausdorff_dt_loss.1} parent=47 // pred_check_branch
        %970 = sbr.rel (%p968) target = $region52
      $region51: #{hausdorff_dt_loss.1} parent=47 // pred_region
        _
      $region52: #{hausdorff_dt_loss.1} parent=47 // pred_fallthru
        _
    $region48: #{hausdorff_dt_loss.1} parent=5 // pred_fallthru
      _
    %p971 = scmp.le.s32.totalorder 2, %s20
    // Predicated region
    $region53: #{hausdorff_dt_loss.1} parent=5 // pred_check
      %p972 = pneg %p971
    $region54: #{hausdorff_dt_loss.1} parent=5 // pred_check_branch
      %974 = sbr.rel (%p972) target = $region56
    $region55: #{hausdorff_dt_loss.1} parent=5 // pred_region
      %s975 = ssub.s32 %s20, 2
      // Predicated region
      $region57: #{hausdorff_dt_loss.1} parent=55 // pred_check
        %p976 = pneg %p239
      $region58: #{hausdorff_dt_loss.1} parent=55 // pred_check_branch
        %978 = sbr.rel (%p976) target = $region60
      $region59: #{hausdorff_dt_loss.1} parent=55 // pred_region
        %p979 = scmp.lt.s32.totalorder %s31, 1
        %s980 = scalar_select %p979, %s31, 1
        %p981 = scmp.lt.s32.totalorder %s32, 3
        %s982 = scalar_select %p981, %s32, 3
        %s983 = smul.addr %s980, 4
        %s984 = sadd.s32 %s982, %s983
        %s985 = scalar_lea.vmem %s8, %s984
      $region60: #{hausdorff_dt_loss.1} parent=55 // pred_fallthru
        _
    $region56: #{hausdorff_dt_loss.1} parent=5 // pred_fallthru
      _
  $region6: #{hausdorff_dt_loss.1} parent=0 // loop_footer
    %s24 = sadd.s32 1, %s20
  $region7: #{hausdorff_dt_loss.1} parent=0 // loop_footer_branch
    %19 = sbr.rel target = $region3
  $region8: #{hausdorff_dt_loss.1} parent=0 // loop_exit
    _

</llo_original>
